<compile_context>
chip_gen: v7x
topology: tpu7x:2x2x1
jax: 0.10.0
libtpu: 0.0.40
codegen_flags: <defaults>
</compile_context>

<pallas_src>
import jax
import jax.numpy as jnp
from jax.experimental import pallas as pl
from jax.experimental.pallas import tpu as pltpu


def _critic_kernel(obs_ref, act_ref, w1o_ref, w1a_ref, b1_ref,
                   w2_ref, b2_ref, w3_ref, b3_ref, q_ref):
    # Layer 1, obs path: bf16 operands on the MXU, f32 accumulation.
    h1 = jnp.dot(obs_ref[...].astype(jnp.bfloat16), w1o_ref[...],
                 preferred_element_type=jnp.float32)

    # Layer 1, action path.  action_dim == 1 -> VPU broadcast outer product
    # (a K=1 matmul is a near-empty MXU pass); otherwise bf16 MXU matmul.
    if act_ref.shape[1] == 1:
        h1 = h1 + act_ref[...] * w1a_ref[...]          # (tb,1)*(1,H) broadcast FMA
    else:
        h1 = h1 + jnp.dot(act_ref[...].astype(jnp.bfloat16),
                          w1a_ref[...].astype(jnp.bfloat16),
                          preferred_element_type=jnp.float32)
    h1 = jnp.maximum(h1 + b1_ref[...], 0.0)            # f32 epilogue (VPU)

    # Layer 2: bf16 MXU matmul, f32 accumulation, f32 epilogue.
    h2 = jnp.dot(h1.astype(jnp.bfloat16), w2_ref[...],
                 preferred_element_type=jnp.float32)
    h2 = jnp.maximum(h2 + b2_ref[...], 0.0)

    # Head (out_dim == 1): VPU multiply, lane reduce to (tb, 1), then
    # transpose only the thin column (not the whole 128x128 slab) to produce
    # the lane-dense (1, tb) row for a single unmasked store.
    prod = h2 * w3_ref[...]                             # (tb, H) * (1, H)
    qcol = jnp.sum(prod, axis=-1, keepdims=True)        # (tb, 1)  lane reduce
    q_ref[...] = (qcol.T + b3_ref[0]).astype(q_ref.dtype)  # (1, tb) unmasked vst


def critic_forward(obs, actions, params, *, block_rows=None):
    """Q(obs, actions) -> [B, 1].  Batch-tiled, pipelined Pallas MLP."""
    B, obs_dim = obs.shape
    act_dim = actions.shape[1]

    # Batch tile: multiple of 8 sublanes.  128 keeps >=2 grid steps (both v7x
    # TensorCores) for moderate B; 256 fills the 256-wide MXU when B >= 512.
    if block_rows is None:
        block_rows = 256 if B >= 512 else 128
    tb = min(block_rows, max(8, int(pl.cdiv(B, 8)) * 8))
    grid_b = int(pl.cdiv(B, tb))
    b_pad = grid_b * tb                                 # no jnp.pad: boundary tile
                                                        # rows are garbage, sliced off.

    w1o, w1a, b1 = params["w1_obs"], params["w1_act"], params["b1"]
    w2, b2 = params["w2"], params["b2"]
    w3, b3 = params["w3"], params["b3"]
    hidden = w2.shape[0]

    full = lambda shape: pl.BlockSpec(shape, lambda i: (0, 0))

    # Advisory cost hint so XLA overlaps neighbors with this tiny kernel.
    flops = 2 * B * hidden * (obs_dim + act_dim + hidden + 1)
    bytes_accessed = int(
        obs.size * obs.dtype.itemsize + actions.size * actions.dtype.itemsize
        + sum(int(p.size) * p.dtype.itemsize for p in (w1o, w1a, b1, w2, b2, w3, b3))
        + b_pad * 4)
    cost = pl.CostEstimate(flops=flops, transcendentals=0,
                           bytes_accessed=bytes_accessed)

    q_rows = pl.pallas_call(
        _critic_kernel,
        out_shape=jax.ShapeDtypeStruct((1, b_pad), jnp.float32),
        grid=(grid_b,),
        in_specs=[
            pl.BlockSpec((tb, obs_dim), lambda i: (i, 0)),   # obs tile
            pl.BlockSpec((tb, act_dim), lambda i: (i, 0)),   # action tile
            full((obs_dim, hidden)),                         # w1_obs (bf16)
            full((act_dim, hidden)),                         # w1_act (f32)
            full((1, hidden)),                               # b1
            full((hidden, hidden)),                          # w2 (bf16)
            full((1, hidden)),                               # b2
            full((1, hidden)),                               # w3 row
            pl.BlockSpec(memory_space=pltpu.MemorySpace.SMEM),  # b3 scalar
        ],
        out_specs=pl.BlockSpec((1, tb), lambda i: (0, i)),   # lane-dense row
        compiler_params=pltpu.CompilerParams(
            dimension_semantics=("parallel",)),
        cost_estimate=cost,
    )(obs, actions, w1o, w1a, b1, w2, b2, w3, b3)

    # (1, b_pad) -> (B, 1)
    return q_rows[0, :B].reshape(B, 1)


def init_params(key, obs_dim, act_dim, hidden):
    """Deterministic synthetic parameter init (no checkpoint load)."""
    ks = jax.random.split(key, 4)
    scale = lambda fan_in: 1.0 / jnp.sqrt(jnp.float32(fan_in))
    in_dim = obs_dim + act_dim
    return {
        # Matmul weights stored bf16 (halves HBM weight traffic, full-rate MXU).
        "w1_obs": (jax.random.normal(ks[0], (obs_dim, hidden), jnp.float32)
                   * scale(in_dim)).astype(jnp.bfloat16),
        "w1_act": jax.random.normal(ks[1], (act_dim, hidden), jnp.float32) * scale(in_dim),
        "b1": jnp.zeros((1, hidden), jnp.float32),
        "w2": (jax.random.normal(ks[2], (hidden, hidden), jnp.float32)
               * scale(hidden)).astype(jnp.bfloat16),
        "b2": jnp.zeros((1, hidden), jnp.float32),
        "w3": jax.random.normal(ks[3], (1, hidden), jnp.float32) * scale(hidden),
        "b3": jnp.zeros((1,), jnp.float32),
    }


def _reference(obs, actions, p):
    """Pure-JAX reference mirroring the kernel's bf16-matmul / f32-accum numerics."""
    h1 = jnp.dot(obs.astype(jnp.bfloat16), p["w1_obs"],
                 preferred_element_type=jnp.float32)
    h1 = h1 + jnp.dot(actions, p["w1_act"], preferred_element_type=jnp.float32)
    h1 = jnp.maximum(h1 + p["b1"], 0.0)
    h2 = jnp.dot(h1.astype(jnp.bfloat16), p["w2"],
                 preferred_element_type=jnp.float32)
    h2 = jnp.maximum(h2 + p["b2"], 0.0)
    return jnp.sum(h2 * p["w3"], axis=-1, keepdims=True) + p["b3"][0]


if __name__ == "__main__":
    B, OBS_DIM, ACT_DIM, HIDDEN = 256, 32, 1, 128   # action_dim=1 per default hparams

    key = jax.random.PRNGKey(0)
    k_obs, k_act, k_par = jax.random.split(key, 3)
    obs = jax.random.normal(k_obs, (B, OBS_DIM), jnp.float32)
    actions = jax.random.normal(k_act, (B, ACT_DIM), jnp.float32)
    params = init_params(k_par, OBS_DIM, ACT_DIM, HIDDEN)

    q = jax.jit(critic_forward)(obs, actions, params)
    q = jax.block_until_ready(q)

    q_ref = _reference(obs, actions, params)
    assert q.shape == (B, 1)
    max_err = float(jnp.max(jnp.abs(q - q_ref)))
    assert jnp.allclose(q, q_ref, atol=1e-2, rtol=1e-2), (
        f"mismatch vs JAX reference, max abs err={max_err}")

    print("KERNEL_OK")
</pallas_src>

<mosaic_0001>
module attributes {stable_mosaic.version = 11 : i64} {
  func.func @_critic_kernel(%arg0: i32, %arg1: memref<128x32xf32, #tpu.memory_space<vmem>>, %arg2: memref<128x1xf32, #tpu.memory_space<vmem>>, %arg3: memref<32x128xbf16, #tpu.memory_space<vmem>>, %arg4: memref<1x128xf32, #tpu.memory_space<vmem>>, %arg5: memref<1x128xf32, #tpu.memory_space<vmem>>, %arg6: memref<128x128xbf16, #tpu.memory_space<vmem>>, %arg7: memref<1x128xf32, #tpu.memory_space<vmem>>, %arg8: memref<1x128xf32, #tpu.memory_space<vmem>>, %arg9: memref<1xf32, #tpu.memory_space<smem>>, %arg10: memref<1x128xf32, #tpu.memory_space<vmem>>) attributes {dimension_semantics = [#tpu.dimension_semantics<parallel>], iteration_bounds = array<i64: 2>, scalar_prefetch = 0 : i64, scratch_operands = 0 : i64, tpu.core_type = #tpu.core_type<tc>, window_params = [{transform_indices = @transform_0, window_bounds = array<i64: 128, 32>}, {transform_indices = @transform_1, window_bounds = array<i64: 128, 1>}, {pipeline_mode = #tpu.pipeline_mode<synchronous>, transform_indices = @transform_2, window_bounds = array<i64: 32, 128>}, {pipeline_mode = #tpu.pipeline_mode<synchronous>, transform_indices = @transform_3, window_bounds = array<i64: 1, 128>}, {pipeline_mode = #tpu.pipeline_mode<synchronous>, transform_indices = @transform_4, window_bounds = array<i64: 1, 128>}, {pipeline_mode = #tpu.pipeline_mode<synchronous>, transform_indices = @transform_5, window_bounds = array<i64: 128, 128>}, {pipeline_mode = #tpu.pipeline_mode<synchronous>, transform_indices = @transform_6, window_bounds = array<i64: 1, 128>}, {pipeline_mode = #tpu.pipeline_mode<synchronous>, transform_indices = @transform_7, window_bounds = array<i64: 1, 128>}, {transform_indices = @transform_8, window_bounds = array<i64: 1>}, {transform_indices = @transform_9, window_bounds = array<i64: 1, 128>}]} {
    %c0 = arith.constant 0 : index
    %c0_0 = arith.constant 0 : index
    %0 = vector.load %arg1[%c0, %c0_0] : memref<128x32xf32, #tpu.memory_space<vmem>>, vector<128x32xf32>
    %1 = arith.truncf %0 : vector<128x32xf32> to vector<128x32xbf16>
    %c0_1 = arith.constant 0 : index
    %c0_2 = arith.constant 0 : index
    %2 = vector.load %arg3[%c0_1, %c0_2] : memref<32x128xbf16, #tpu.memory_space<vmem>>, vector<32x128xbf16>
    %cst = arith.constant dense<0.000000e+00> : vector<128x128xf32>
    %3 = tpu.matmul %1, %2, %cst {dimension_numbers = #tpu.dot_dimension_numbers<[1], [0], [0], [1], [0, 0, 1, 1], [], []>} : vector<128x32xbf16>, vector<32x128xbf16>, vector<128x128xf32> -> vector<128x128xf32>
    %c0_3 = arith.constant 0 : index
    %c0_4 = arith.constant 0 : index
    %4 = vector.load %arg2[%c0_3, %c0_4] : memref<128x1xf32, #tpu.memory_space<vmem>>, vector<128x1xf32>
    %c0_5 = arith.constant 0 : index
    %c0_6 = arith.constant 0 : index
    %5 = vector.load %arg4[%c0_5, %c0_6] : memref<1x128xf32, #tpu.memory_space<vmem>>, vector<1x128xf32>
    %6 = vector.broadcast %4 : vector<128x1xf32> to vector<128x128xf32>
    %7 = vector.broadcast %5 : vector<1x128xf32> to vector<128x128xf32>
    %8 = arith.mulf %6, %7 : vector<128x128xf32>
    %9 = arith.addf %3, %8 : vector<128x128xf32>
    %c0_7 = arith.constant 0 : index
    %c0_8 = arith.constant 0 : index
    %10 = vector.load %arg5[%c0_7, %c0_8] : memref<1x128xf32, #tpu.memory_space<vmem>>, vector<1x128xf32>
    %11 = vector.broadcast %10 : vector<1x128xf32> to vector<128x128xf32>
    %12 = arith.addf %9, %11 : vector<128x128xf32>
    %cst_9 = arith.constant 0.000000e+00 : f32
    %13 = vector.broadcast %cst_9 : f32 to vector<128x128xf32>
    %14 = arith.maximumf %12, %13 : vector<128x128xf32>
    %15 = arith.truncf %14 : vector<128x128xf32> to vector<128x128xbf16>
    %c0_10 = arith.constant 0 : index
    %c0_11 = arith.constant 0 : index
    %16 = vector.load %arg6[%c0_10, %c0_11] : memref<128x128xbf16, #tpu.memory_space<vmem>>, vector<128x128xbf16>
    %cst_12 = arith.constant dense<0.000000e+00> : vector<128x128xf32>
    %17 = tpu.matmul %15, %16, %cst_12 {dimension_numbers = #tpu.dot_dimension_numbers<[1], [0], [0], [1], [0, 0, 1, 1], [], []>} : vector<128x128xbf16>, vector<128x128xbf16>, vector<128x128xf32> -> vector<128x128xf32>
    %c0_13 = arith.constant 0 : index
    %c0_14 = arith.constant 0 : index
    %18 = vector.load %arg7[%c0_13, %c0_14] : memref<1x128xf32, #tpu.memory_space<vmem>>, vector<1x128xf32>
    %19 = vector.broadcast %18 : vector<1x128xf32> to vector<128x128xf32>
    %20 = arith.addf %17, %19 : vector<128x128xf32>
    %cst_15 = arith.constant 0.000000e+00 : f32
    %21 = vector.broadcast %cst_15 : f32 to vector<128x128xf32>
    %22 = arith.maximumf %20, %21 : vector<128x128xf32>
    %c0_16 = arith.constant 0 : index
    %c0_17 = arith.constant 0 : index
    %23 = vector.load %arg8[%c0_16, %c0_17] : memref<1x128xf32, #tpu.memory_space<vmem>>, vector<1x128xf32>
    %24 = vector.broadcast %23 : vector<1x128xf32> to vector<128x128xf32>
    %25 = arith.mulf %22, %24 : vector<128x128xf32>
    %cst_18 = arith.constant dense<0.000000e+00> : vector<128xf32>
    %26 = vector.multi_reduction <add>, %25, %cst_18 [1] : vector<128x128xf32> to vector<128xf32>
    %27 = vector.shape_cast %26 : vector<128xf32> to vector<128x1xf32>
    %28 = tpu.transpose %27, [1, 0] : vector<128x1xf32> -> vector<1x128xf32>
    %c0_19 = arith.constant 0 : index
    %29 = memref.load %arg9[%c0_19] : memref<1xf32, #tpu.memory_space<smem>>
    %30 = vector.broadcast %29 : f32 to vector<1x128xf32>
    %31 = arith.addf %28, %30 : vector<1x128xf32>
    %c0_20 = arith.constant 0 : index
    %c0_21 = arith.constant 0 : index
    %32 = vector.load %arg10[%c0_20, %c0_21] : memref<1x128xf32, #tpu.memory_space<vmem>>, vector<1x128xf32>
    tpu.vector_store %arg10[%c0_20, %c0_21], %31 {strides = array<i32>} : memref<1x128xf32, #tpu.memory_space<vmem>>, vector<1x128xf32>,
    return
  }
  func.func @transform_0(%arg0: i32) -> (i32, i32) {
    %c0_i32 = arith.constant 0 : i32
    %c0_i32_0 = arith.constant 0 : i32
    return %arg0, %c0_i32 : i32, i32
  }
  func.func @transform_1(%arg0: i32) -> (i32, i32) {
    %c0_i32 = arith.constant 0 : i32
    %c0_i32_0 = arith.constant 0 : i32
    return %arg0, %c0_i32 : i32, i32
  }
  func.func @transform_2(%arg0: i32) -> (i32, i32) {
    %c0_i32 = arith.constant 0 : i32
    %c0_i32_0 = arith.constant 0 : i32
    %c0_i32_1 = arith.constant 0 : i32
    return %c0_i32, %c0_i32_0 : i32, i32
  }
  func.func @transform_3(%arg0: i32) -> (i32, i32) {
    %c0_i32 = arith.constant 0 : i32
    %c0_i32_0 = arith.constant 0 : i32
    %c0_i32_1 = arith.constant 0 : i32
    return %c0_i32, %c0_i32_0 : i32, i32
  }
  func.func @transform_4(%arg0: i32) -> (i32, i32) {
    %c0_i32 = arith.constant 0 : i32
    %c0_i32_0 = arith.constant 0 : i32
    %c0_i32_1 = arith.constant 0 : i32
    return %c0_i32, %c0_i32_0 : i32, i32
  }
  func.func @transform_5(%arg0: i32) -> (i32, i32) {
    %c0_i32 = arith.constant 0 : i32
    %c0_i32_0 = arith.constant 0 : i32
    %c0_i32_1 = arith.constant 0 : i32
    return %c0_i32, %c0_i32_0 : i32, i32
  }
  func.func @transform_6(%arg0: i32) -> (i32, i32) {
    %c0_i32 = arith.constant 0 : i32
    %c0_i32_0 = arith.constant 0 : i32
    %c0_i32_1 = arith.constant 0 : i32
    return %c0_i32, %c0_i32_0 : i32, i32
  }
  func.func @transform_7(%arg0: i32) -> (i32, i32) {
    %c0_i32 = arith.constant 0 : i32
    %c0_i32_0 = arith.constant 0 : i32
    %c0_i32_1 = arith.constant 0 : i32
    return %c0_i32, %c0_i32_0 : i32, i32
  }
  func.func @transform_8(%arg0: i32) -> i32 {
    %c0_i32 = arith.constant 0 : i32
    %c0_i32_0 = arith.constant 0 : i32
    return %c0_i32 : i32
  }
  func.func @transform_9(%arg0: i32) -> (i32, i32) {
    %c0_i32 = arith.constant 0 : i32
    %c0_i32_0 = arith.constant 0 : i32
    return %c0_i32, %arg0 : i32, i32
  }
}

</mosaic_0001>

<llo_original>
// kernel: critic_forward.1
$region0: #{critic_forward.1}
  #allocation0 [shape = 'u32[]', space=smem, size = 0x4, offset = 0x4, fixed_abs, tag = 'smem constant byte address 0x4 - core index']
  #allocation1 [shape = 'u32[144,128]{1,0:T(1,128)}', space=vmem, size = 0x12000, scoped, tag = 'internal scratch']
  #allocation2 [shape = 'f32[1]{0:T(128)S(6)}', space=smem, size = 0x200, scoped, tag = 'scoped memory for critic_forward.1']
  %s0 = inlined_call_operand.vmem [shape: f32[256,32], index: 0, kind: input, shape index: {}]
  %s1 = inlined_call_operand.vmem [shape: f32[256,1], index: 1, kind: input, shape index: {}]
  %s2 = inlined_call_operand.vmem [shape: bf16[32,128], index: 2, kind: input, shape index: {}]
  %s3 = inlined_call_operand.vmem [shape: f32[1,128], index: 3, kind: input, shape index: {}]
  %s4 = inlined_call_operand.vmem [shape: f32[1,128], index: 4, kind: input, shape index: {}]
  %s5 = inlined_call_operand.vmem [shape: bf16[128,128], index: 5, kind: input, shape index: {}]
  %s6 = inlined_call_operand.vmem [shape: f32[1,128], index: 6, kind: input, shape index: {}]
  %s7 = inlined_call_operand.vmem [shape: f32[1,128], index: 7, kind: input, shape index: {}]
  %s8 = inlined_call_operand.<no memory space> [shape: f32[1], index: 8, kind: input, shape index: {}]
  %s9 = inlined_call_operand.hbm [shape: f32[1,256], index: 9, kind: output, shape index: {}]
  %s10 = sld [smem:[#allocation0]]
  $region69: #{critic_forward.1} parent=0
    _
  %s12 = ssub.s32 1, %s10
  %s13 = scalar_select 0, %s12, %s10
  %14 = sst [smem:[#allocation2]] %s8
  $region1: #{critic_forward.1} parent=0
    #allocation3 [shape = 'u8[1024]{0}', space=vmem, size = 0x400, scoped, tag = 'output window, operand 0']
    #allocation4 [shape = 's32[2]{0}', space=sflag, size = 0x8, scoped, tag = 'scoped memory for critic_forward.1']
    %15 = vsyncpa [#allocation4], 0
    %s16 = scalar_lea.sflag [#allocation4], 1
    %17 = vsyncpa %s16, 0
    loop: start=0, step=1, limit=4
    $region2: #{critic_forward.1} parent=1 // loop_pre_header
      _
    $region3: #{critic_forward.1} parent=1 // loop_header
      %s19 = sphi 0, %s23
      %p20 = scmp.ge.s32.totalorder %s19, 4
      %s29 = sphi 0, %s31
      %s32 = sphi 0, %s29
      %s33 = sphi 0, %s32
      %s49 = sphi 0, %s33
      %s55 = sphi 0, %s57
      %s58 = sphi 0, %s55
      %s59 = sphi 0, %s58
      %s75 = sphi 0, %s59
      %s79 = sphi 0, %s79
      %s81 = sphi 0, %s79
      %s82 = sphi 0, %s81
      %s96 = sphi 0, %s82
      %s100 = sphi 0, %s100
      %s102 = sphi 0, %s100
      %s103 = sphi 0, %s102
      %s117 = sphi 0, %s103
      %s121 = sphi 0, %s121
      %s123 = sphi 0, %s121
      %s124 = sphi 0, %s123
      %s138 = sphi 0, %s124
      %s142 = sphi 0, %s142
      %s144 = sphi 0, %s142
      %s145 = sphi 0, %s144
      %s159 = sphi 0, %s145
      %s163 = sphi 0, %s163
      %s165 = sphi 0, %s163
      %s166 = sphi 0, %s165
      %s180 = sphi 0, %s166
      %s184 = sphi 0, %s184
      %s186 = sphi 0, %s184
      %s187 = sphi 0, %s186
      %s201 = sphi 0, %s187
      %s205 = sphi 0, %s205
      %s207 = sphi 0, %s205
      %s208 = sphi 0, %s207
      %s222 = sphi 0, %s208
      %s228 = sphi 0, %s230
      %s231 = sphi 0, %s228
      %s232 = sphi 0, %s231
      %s248 = sphi 0, %s232
    $region4: #{critic_forward.1} parent=1 // loop_header_branch
      %22 = sbr.rel (%p20) target = $region8
    $region5: #{critic_forward.1} parent=1 // loop_body
      %s24 = ssub.s32 %s19, 1
      %s25 = ssub.s32 %s19, 2
      %s26 = sadd.s32 %s19, 1
      %s27 = ssub.s32 %s19, %s26
      %p28 = scmp.eq.s32.totalorder %s27, 0
      %s30 = sadd.s32 %s29, 1
      %s31 = scalar_select %p28, %s29, %s30
      %p34 = pneg %p28
      %p35 = scmp.eq.s32.totalorder %s19, 1
      %p36 = por %p34, %p35
      %p37 = scmp.ne.s32.totalorder %s29, %s32
      %p38 = scmp.eq.s32.totalorder %s19, 0
      %p39 = por %p37, %p38
      %p40 = scmp.ne.s32.totalorder %s29, %s32
      %p41 = scmp.eq.s32.totalorder %s24, 1
      %p42 = por %p40, %p41
      %p43 = scmp.ne.s32.totalorder %s32, %s33
      %p44 = scmp.eq.s32.totalorder %s24, 0
      %p45 = por %p43, %p44
      %p46 = scmp.ne.s32.totalorder %s32, %s33
      %p47 = scmp.eq.s32.totalorder %s25, 1
      %p48 = por %p46, %p47
      %p50 = scmp.ne.s32.totalorder %s33, %s49
      %p51 = scmp.eq.s32.totalorder %s25, 0
      %p52 = por %p50, %p51
      %s53 = ssub.s32 %s19, %s26
      %p54 = scmp.eq.s32.totalorder %s53, 0
      %s56 = sadd.s32 %s55, 1
      %s57 = scalar_select %p54, %s55, %s56
      %p60 = pneg %p54
      %p61 = scmp.eq.s32.totalorder %s19, 1
      %p62 = por %p60, %p61
      %p63 = scmp.ne.s32.totalorder %s55, %s58
      %p64 = scmp.eq.s32.totalorder %s19, 0
      %p65 = por %p63, %p64
      %p66 = scmp.ne.s32.totalorder %s55, %s58
      %p67 = scmp.eq.s32.totalorder %s24, 1
      %p68 = por %p66, %p67
      %p69 = scmp.ne.s32.totalorder %s58, %s59
      %p70 = scmp.eq.s32.totalorder %s24, 0
      %p71 = por %p69, %p70
      %p72 = scmp.ne.s32.totalorder %s58, %s59
      %p73 = scmp.eq.s32.totalorder %s25, 1
      %p74 = por %p72, %p73
      %p76 = scmp.ne.s32.totalorder %s59, %s75
      %p77 = scmp.eq.s32.totalorder %s25, 0
      %p78 = por %p76, %p77
      %s80 = sadd.s32 %s79, 1
      %p83 = scmp.eq.s32.totalorder %s19, 1
      %p84 = scmp.ne.s32.totalorder %s79, %s81
      %p85 = scmp.eq.s32.totalorder %s19, 0
      %p86 = por %p84, %p85
      %p87 = scmp.ne.s32.totalorder %s79, %s81
      %p88 = scmp.eq.s32.totalorder %s24, 1
      %p89 = por %p87, %p88
      %p90 = scmp.ne.s32.totalorder %s81, %s82
      %p91 = scmp.eq.s32.totalorder %s24, 0
      %p92 = por %p90, %p91
      %p93 = scmp.ne.s32.totalorder %s81, %s82
      %p94 = scmp.eq.s32.totalorder %s25, 1
      %p95 = por %p93, %p94
      %p97 = scmp.ne.s32.totalorder %s82, %s96
      %p98 = scmp.eq.s32.totalorder %s25, 0
      %p99 = por %p97, %p98
      %s101 = sadd.s32 %s100, 1
      %p104 = scmp.eq.s32.totalorder %s19, 1
      %p105 = scmp.ne.s32.totalorder %s100, %s102
      %p106 = scmp.eq.s32.totalorder %s19, 0
      %p107 = por %p105, %p106
      %p108 = scmp.ne.s32.totalorder %s100, %s102
      %p109 = scmp.eq.s32.totalorder %s24, 1
      %p110 = por %p108, %p109
      %p111 = scmp.ne.s32.totalorder %s102, %s103
      %p112 = scmp.eq.s32.totalorder %s24, 0
      %p113 = por %p111, %p112
      %p114 = scmp.ne.s32.totalorder %s102, %s103
      %p115 = scmp.eq.s32.totalorder %s25, 1
      %p116 = por %p114, %p115
      %p118 = scmp.ne.s32.totalorder %s103, %s117
      %p119 = scmp.eq.s32.totalorder %s25, 0
      %p120 = por %p118, %p119
      %s122 = sadd.s32 %s121, 1
      %p125 = scmp.eq.s32.totalorder %s19, 1
      %p126 = scmp.ne.s32.totalorder %s121, %s123
      %p127 = scmp.eq.s32.totalorder %s19, 0
      %p128 = por %p126, %p127
      %p129 = scmp.ne.s32.totalorder %s121, %s123
      %p130 = scmp.eq.s32.totalorder %s24, 1
      %p131 = por %p129, %p130
      %p132 = scmp.ne.s32.totalorder %s123, %s124
      %p133 = scmp.eq.s32.totalorder %s24, 0
      %p134 = por %p132, %p133
      %p135 = scmp.ne.s32.totalorder %s123, %s124
      %p136 = scmp.eq.s32.totalorder %s25, 1
      %p137 = por %p135, %p136
      %p139 = scmp.ne.s32.totalorder %s124, %s138
      %p140 = scmp.eq.s32.totalorder %s25, 0
      %p141 = por %p139, %p140
      %s143 = sadd.s32 %s142, 1
      %p146 = scmp.eq.s32.totalorder %s19, 1
      %p147 = scmp.ne.s32.totalorder %s142, %s144
      %p148 = scmp.eq.s32.totalorder %s19, 0
      %p149 = por %p147, %p148
      %p150 = scmp.ne.s32.totalorder %s142, %s144
      %p151 = scmp.eq.s32.totalorder %s24, 1
      %p152 = por %p150, %p151
      %p153 = scmp.ne.s32.totalorder %s144, %s145
      %p154 = scmp.eq.s32.totalorder %s24, 0
      %p155 = por %p153, %p154
      %p156 = scmp.ne.s32.totalorder %s144, %s145
      %p157 = scmp.eq.s32.totalorder %s25, 1
      %p158 = por %p156, %p157
      %p160 = scmp.ne.s32.totalorder %s145, %s159
      %p161 = scmp.eq.s32.totalorder %s25, 0
      %p162 = por %p160, %p161
      %s164 = sadd.s32 %s163, 1
      %p167 = scmp.eq.s32.totalorder %s19, 1
      %p168 = scmp.ne.s32.totalorder %s163, %s165
      %p169 = scmp.eq.s32.totalorder %s19, 0
      %p170 = por %p168, %p169
      %p171 = scmp.ne.s32.totalorder %s163, %s165
      %p172 = scmp.eq.s32.totalorder %s24, 1
      %p173 = por %p171, %p172
      %p174 = scmp.ne.s32.totalorder %s165, %s166
      %p175 = scmp.eq.s32.totalorder %s24, 0
      %p176 = por %p174, %p175
      %p177 = scmp.ne.s32.totalorder %s165, %s166
      %p178 = scmp.eq.s32.totalorder %s25, 1
      %p179 = por %p177, %p178
      %p181 = scmp.ne.s32.totalorder %s166, %s180
      %p182 = scmp.eq.s32.totalorder %s25, 0
      %p183 = por %p181, %p182
      %s185 = sadd.s32 %s184, 1
      %p188 = scmp.eq.s32.totalorder %s19, 1
      %p189 = scmp.ne.s32.totalorder %s184, %s186
      %p190 = scmp.eq.s32.totalorder %s19, 0
      %p191 = por %p189, %p190
      %p192 = scmp.ne.s32.totalorder %s184, %s186
      %p193 = scmp.eq.s32.totalorder %s24, 1
      %p194 = por %p192, %p193
      %p195 = scmp.ne.s32.totalorder %s186, %s187
      %p196 = scmp.eq.s32.totalorder %s24, 0
      %p197 = por %p195, %p196
      %p198 = scmp.ne.s32.totalorder %s186, %s187
      %p199 = scmp.eq.s32.totalorder %s25, 1
      %p200 = por %p198, %p199
      %p202 = scmp.ne.s32.totalorder %s187, %s201
      %p203 = scmp.eq.s32.totalorder %s25, 0
      %p204 = por %p202, %p203
      %s206 = sadd.s32 %s205, 1
      %p209 = scmp.eq.s32.totalorder %s19, 1
      %p210 = scmp.ne.s32.totalorder %s205, %s207
      %p211 = scmp.eq.s32.totalorder %s19, 0
      %p212 = por %p210, %p211
      %p213 = scmp.ne.s32.totalorder %s205, %s207
      %p214 = scmp.eq.s32.totalorder %s24, 1
      %p215 = por %p213, %p214
      %p216 = scmp.ne.s32.totalorder %s207, %s208
      %p217 = scmp.eq.s32.totalorder %s24, 0
      %p218 = por %p216, %p217
      %p219 = scmp.ne.s32.totalorder %s207, %s208
      %p220 = scmp.eq.s32.totalorder %s25, 1
      %p221 = por %p219, %p220
      %p223 = scmp.ne.s32.totalorder %s208, %s222
      %p224 = scmp.eq.s32.totalorder %s25, 0
      %p225 = por %p223, %p224
      %s226 = ssub.s32 %s19, %s26
      %p227 = scmp.eq.s32.totalorder %s226, 0
      %s229 = sadd.s32 %s228, 1
      %s230 = scalar_select %p227, %s228, %s229
      %p233 = pneg %p227
      %p234 = scmp.eq.s32.totalorder %s19, 1
      %p235 = por %p233, %p234
      %p236 = scmp.ne.s32.totalorder %s228, %s231
      %p237 = scmp.eq.s32.totalorder %s19, 0
      %p238 = por %p236, %p237
      %p239 = scmp.ne.s32.totalorder %s228, %s231
      %p240 = scmp.eq.s32.totalorder %s24, 1
      %p241 = por %p239, %p240
      %p242 = scmp.ne.s32.totalorder %s231, %s232
      %p243 = scmp.eq.s32.totalorder %s24, 0
      %p244 = por %p242, %p243
      %p245 = scmp.ne.s32.totalorder %s231, %s232
      %p246 = scmp.eq.s32.totalorder %s25, 1
      %p247 = por %p245, %p246
      %p249 = scmp.ne.s32.totalorder %s232, %s248
      %p250 = scmp.eq.s32.totalorder %s25, 0
      %p251 = por %p249, %p250
      %p252 = scmp.le.s32.totalorder 1, %s19
      %p253 = scmp.lt.s32.totalorder %s19, 3
      %p254 = pnand %p252, %p253
      %p255 = pneg %p254
      // Predicated region
      $region9: #{critic_forward.1} parent=5 // pred_check
        _
      $region10: #{critic_forward.1} parent=5 // pred_check_branch
        %257 = sbr.rel (%p254) target = $region12
      $region11: #{critic_forward.1} parent=5 // pred_region
        %s258 = ssub.s32 %s19, 1
        // Predicated region
        $region13: #{critic_forward.1} parent=11 // pred_check
          %p259 = pneg %p92
        $region14: #{critic_forward.1} parent=11 // pred_check_branch
          %261 = sbr.rel (%p259) target = $region16
        $region15: #{critic_forward.1} parent=11 // pred_region
          _
        $region16: #{critic_forward.1} parent=11 // pred_fallthru
          _
        // Predicated region
        $region17: #{critic_forward.1} parent=11 // pred_check
          %p262 = pneg %p113
        $region18: #{critic_forward.1} parent=11 // pred_check_branch
          %264 = sbr.rel (%p262) target = $region20
        $region19: #{critic_forward.1} parent=11 // pred_region
          _
        $region20: #{critic_forward.1} parent=11 // pred_fallthru
          _
        // Predicated region
        $region21: #{critic_forward.1} parent=11 // pred_check
          %p265 = pneg %p134
        $region22: #{critic_forward.1} parent=11 // pred_check_branch
          %267 = sbr.rel (%p265) target = $region24
        $region23: #{critic_forward.1} parent=11 // pred_region
          _
        $region24: #{critic_forward.1} parent=11 // pred_fallthru
          _
        // Predicated region
        $region25: #{critic_forward.1} parent=11 // pred_check
          %p268 = pneg %p155
        $region26: #{critic_forward.1} parent=11 // pred_check_branch
          %270 = sbr.rel (%p268) target = $region28
        $region27: #{critic_forward.1} parent=11 // pred_region
          _
        $region28: #{critic_forward.1} parent=11 // pred_fallthru
          _
        // Predicated region
        $region29: #{critic_forward.1} parent=11 // pred_check
          %p271 = pneg %p176
        $region30: #{critic_forward.1} parent=11 // pred_check_branch
          %273 = sbr.rel (%p271) target = $region32
        $region31: #{critic_forward.1} parent=11 // pred_region
          _
        $region32: #{critic_forward.1} parent=11 // pred_fallthru
          _
        // Predicated region
        $region33: #{critic_forward.1} parent=11 // pred_check
          %p274 = pneg %p197
        $region34: #{critic_forward.1} parent=11 // pred_check_branch
          %276 = sbr.rel (%p274) target = $region36
        $region35: #{critic_forward.1} parent=11 // pred_region
          _
        $region36: #{critic_forward.1} parent=11 // pred_fallthru
          _
        // Predicated region
        $region37: #{critic_forward.1} parent=11 // pred_check
          %p277 = pneg %p218
        $region38: #{critic_forward.1} parent=11 // pred_check_branch
          %279 = sbr.rel (%p277) target = $region40
        $region39: #{critic_forward.1} parent=11 // pred_region
          _
        $region40: #{critic_forward.1} parent=11 // pred_fallthru
          _
      $region12: #{critic_forward.1} parent=5 // pred_fallthru
        _
      %p280 = scmp.lt.s32.totalorder %s19, 2
      // Predicated region
      $region41: #{critic_forward.1} parent=5 // pred_check
        %p281 = pneg %p280
      $region42: #{critic_forward.1} parent=5 // pred_check_branch
        %283 = sbr.rel (%p281) target = $region44
      $region43: #{critic_forward.1} parent=5 // pred_region
        // Predicated region
        $region45: #{critic_forward.1} parent=43 // pred_check
          %p284 = pneg %p39
        $region46: #{critic_forward.1} parent=43 // pred_check_branch
          %286 = sbr.rel (%p284) target = $region48
        $region47: #{critic_forward.1} parent=43 // pred_region
          %s287 = smul.u32 16, %s19
          %p288 = scmp.lt.s32.totalorder %s287, 31
          %s289 = scalar_select %p288, %s287, 31
          %s290 = smul.addr %s289, 8
          %s291 = scalar_lea.vmem %s0, %s290
          %s292 = smul.u32 16, %s19
        $region48: #{critic_forward.1} parent=43 // pred_fallthru
          _
        // Predicated region
        $region49: #{critic_forward.1} parent=43 // pred_check
          %p293 = pneg %p65
        $region50: #{critic_forward.1} parent=43 // pred_check_branch
          %295 = sbr.rel (%p293) target = $region52
        $region51: #{critic_forward.1} parent=43 // pred_region
          %s296 = smul.u32 16, %s19
          %p297 = scmp.lt.s32.totalorder %s296, 31
          %s298 = scalar_select %p297, %s296, 31
          %s299 = smul.addr %s298, 8
          %s300 = scalar_lea.vmem %s1, %s299
          %s301 = smul.u32 16, %s19
        $region52: #{critic_forward.1} parent=43 // pred_fallthru
          _
      $region44: #{critic_forward.1} parent=5 // pred_fallthru
        _
      %p302 = scmp.le.s32.totalorder 1, %s19
      %p303 = scmp.lt.s32.totalorder %s19, 3
      %p304 = pnand %p302, %p303
      %p305 = pneg %p304
      // Predicated region
      $region53: #{critic_forward.1} parent=5 // pred_check
        _
      $region54: #{critic_forward.1} parent=5 // pred_check_branch
        %307 = sbr.rel (%p304) target = $region56
      $region55: #{critic_forward.1} parent=5 // pred_region
        %s308 = ssub.s32 %s19, 1
        %s309 = smul.u32 16, %s24
        %p310 = scmp.lt.s32.totalorder %s309, 31
        %s311 = scalar_select %p310, %s309, 31
        %s312 = smul.addr %s311, 8
        %s313 = scalar_lea.vmem %s0, %s312
        %p314 = pneg %p45
        %p315 = pneg %p42
        %s316 = smul.u32 16, %s24
        %p317 = scmp.lt.s32.totalorder %s316, 31
        %s318 = scalar_select %p317, %s316, 31
        %s319 = smul.addr %s318, 8
        %s320 = scalar_lea.vmem %s1, %s319
        %p321 = pneg %p71
        %p322 = pneg %p68
        %p323 = pneg %p92
        %p324 = pneg %p89
        %p325 = pneg %p113
        %p326 = pneg %p110
        %p327 = pneg %p134
        %p328 = pneg %p131
        %p329 = pneg %p155
        %p330 = pneg %p152
        %p331 = pneg %p176
        %p332 = pneg %p173
        %p333 = pneg %p197
        %p334 = pneg %p194
        %p335 = pneg %p218
        %p336 = pneg %p215
        %p337 = pneg %p244
        %p338 = pneg %p241
        %s339 = sand.u32 %s231, 1
        %s340 = scalar_lea.sflag [#allocation4], %s339
        %s341 = sand.u32 %s231, 1
        %s342 = scalar_lea.vmem [#allocation3], %s341
        %s343 = smul.u32 16, %s24
        %p344 = scmp.lt.s32.totalorder %s343, 31
        %s345 = scalar_select %p344, %s343, 31
        %s346 = smul.addr %s345, 8
        %s347 = scalar_lea.vmem %s0, %s346
        %s348 = smul.u32 16, %s24
        %s349 = smul.u32 16, %s24
        %p350 = scmp.lt.s32.totalorder %s349, 31
        %s351 = scalar_select %p350, %s349, 31
        %s352 = smul.addr %s351, 8
        %s353 = scalar_lea.vmem %s1, %s352
        %s354 = smul.u32 16, %s24
        %v356 = vld [vmem:[%s347] sm:$0xff]
        %v357 = vld [vmem:[%s347 + $0x8] sm:$0xff]
        %v358 = vld [vmem:[%s347 + $0x10] sm:$0xff]
        %v359 = vld [vmem:[%s347 + $0x18] sm:$0xff]
        %v360 = vld [vmem:[%s347 + $0x20] sm:$0xff]
        %v361 = vld [vmem:[%s347 + $0x28] sm:$0xff]
        %v362 = vld [vmem:[%s347 + $0x30] sm:$0xff]
        %v363 = vld [vmem:[%s347 + $0x38] sm:$0xff]
        %v364 = vld [vmem:[%s347 + $0x40] sm:$0xff]
        %v365 = vld [vmem:[%s347 + $0x48] sm:$0xff]
        %v366 = vld [vmem:[%s347 + $0x50] sm:$0xff]
        %v367 = vld [vmem:[%s347 + $0x58] sm:$0xff]
        %v368 = vld [vmem:[%s347 + $0x60] sm:$0xff]
        %v369 = vld [vmem:[%s347 + $0x68] sm:$0xff]
        %v370 = vld [vmem:[%s347 + $0x70] sm:$0xff]
        %v371 = vld [vmem:[%s347 + $0x78] sm:$0xff]
        %v372 = vpack.c.bf16 %v357, %v356
        %v373 = vpack.c.bf16 %v359, %v358
        %v374 = vpack.c.bf16 %v361, %v360
        %v375 = vpack.c.bf16 %v363, %v362
        %v376 = vpack.c.bf16 %v365, %v364
        %v377 = vpack.c.bf16 %v367, %v366
        %v378 = vpack.c.bf16 %v369, %v368
        %v379 = vpack.c.bf16 %v371, %v370
        %v380 = vld [vmem:[%s2] sm:$0xf]
        %v381 = vld [vmem:[%s2 + $0x4] sm:$0xf]
        %v382 = vld [vmem:[%s2 + $0x8] sm:$0xf]
        %v383 = vld [vmem:[%s2 + $0xc] sm:$0xf]
        %v384 = vld [vmem:[%s353] sm:$0xff]
        %v385 = vld [vmem:[%s353 + $0x8] sm:$0xff]
        %v386 = vld [vmem:[%s353 + $0x10] sm:$0xff]
        %v387 = vld [vmem:[%s353 + $0x18] sm:$0xff]
        %v388 = vld [vmem:[%s353 + $0x20] sm:$0xff]
        %v389 = vld [vmem:[%s353 + $0x28] sm:$0xff]
        %v390 = vld [vmem:[%s353 + $0x30] sm:$0xff]
        %v391 = vld [vmem:[%s353 + $0x38] sm:$0xff]
        %v392 = vld [vmem:[%s353 + $0x40] sm:$0xff]
        %v393 = vld [vmem:[%s353 + $0x48] sm:$0xff]
        %v394 = vld [vmem:[%s353 + $0x50] sm:$0xff]
        %v395 = vld [vmem:[%s353 + $0x58] sm:$0xff]
        %v396 = vld [vmem:[%s353 + $0x60] sm:$0xff]
        %v397 = vld [vmem:[%s353 + $0x68] sm:$0xff]
        %v398 = vld [vmem:[%s353 + $0x70] sm:$0xff]
        %v399 = vld [vmem:[%s353 + $0x78] sm:$0xff]
        %v400 = vld [vmem:[%s3] sm:$0x1]
        %402 = vset.pattern.permute.xlu0 0
        %403 = vperm.xlu0 %402, %v384
        %v404 = vpop.permute.xlu0 %403
        %407 = vset.pattern.permute.xlu0 0
        %408 = vperm.xlu0 %407, %v385
        %v409 = vpop.permute.xlu0 %408
        %412 = vset.pattern.permute.xlu0 0
        %413 = vperm.xlu0 %412, %v386
        %v414 = vpop.permute.xlu0 %413
        %417 = vset.pattern.permute.xlu0 0
        %418 = vperm.xlu0 %417, %v387
        %v419 = vpop.permute.xlu0 %418
        %422 = vset.pattern.permute.xlu0 0
        %423 = vperm.xlu0 %422, %v388
        %v424 = vpop.permute.xlu0 %423
        %427 = vset.pattern.permute.xlu0 0
        %428 = vperm.xlu0 %427, %v389
        %v429 = vpop.permute.xlu0 %428
        %432 = vset.pattern.permute.xlu0 0
        %433 = vperm.xlu0 %432, %v390
        %v434 = vpop.permute.xlu0 %433
        %437 = vset.pattern.permute.xlu0 0
        %438 = vperm.xlu0 %437, %v391
        %v439 = vpop.permute.xlu0 %438
        %442 = vset.pattern.permute.xlu0 0
        %443 = vperm.xlu0 %442, %v392
        %v444 = vpop.permute.xlu0 %443
        %447 = vset.pattern.permute.xlu0 0
        %448 = vperm.xlu0 %447, %v393
        %v449 = vpop.permute.xlu0 %448
        %452 = vset.pattern.permute.xlu0 0
        %453 = vperm.xlu0 %452, %v394
        %v454 = vpop.permute.xlu0 %453
        %457 = vset.pattern.permute.xlu0 0
        %458 = vperm.xlu0 %457, %v395
        %v459 = vpop.permute.xlu0 %458
        %462 = vset.pattern.permute.xlu0 0
        %463 = vperm.xlu0 %462, %v396
        %v464 = vpop.permute.xlu0 %463
        %467 = vset.pattern.permute.xlu0 0
        %468 = vperm.xlu0 %467, %v397
        %v469 = vpop.permute.xlu0 %468
        %472 = vset.pattern.permute.xlu0 0
        %473 = vperm.xlu0 %472, %v398
        %v474 = vpop.permute.xlu0 %473
        %477 = vset.pattern.permute.xlu0 0
        %478 = vperm.xlu0 %477, %v399
        %v479 = vpop.permute.xlu0 %478
        %v482 = vlaneseq
        %v483 = vshrl.u32 %v482, 7
        %v484 = vsub.s32 0, %v483
        %v485 = vrot.slane %v400, %v484
        %v487 = vmul.f32 %v404, %v485
        %v488 = vmul.f32 %v409, %v485
        %v489 = vmul.f32 %v414, %v485
        %v490 = vmul.f32 %v419, %v485
        %v491 = vmul.f32 %v424, %v485
        %v492 = vmul.f32 %v429, %v485
        %v493 = vmul.f32 %v434, %v485
        %v494 = vmul.f32 %v439, %v485
        %v495 = vmul.f32 %v444, %v485
        %v496 = vmul.f32 %v449, %v485
        %v497 = vmul.f32 %v454, %v485
        %v498 = vmul.f32 %v459, %v485
        %v499 = vmul.f32 %v464, %v485
        %v500 = vmul.f32 %v469, %v485
        %v501 = vmul.f32 %v474, %v485
        %v502 = vmul.f32 %v479, %v485
        %v507 = vunpack.c.l.b16 %v380
        %v508 = vunpack.c.l.b16 %v381
        %v509 = vunpack.c.l.b16 %v382
        %v510 = vunpack.c.l.b16 %v383
        %v511 = vpack.c.b16 %v508, %v507
        %v512 = vpack.c.b16 %v510, %v509
        %vm515 = vcmask 261120
        %v517 = vsel %vm515, %v372, 0
        %v520 = vsel %vm515, %v373, 0
        %v523 = vsel %vm515, %v374, 0
        %v526 = vsel %vm515, %v375, 0
        %v529 = vsel %vm515, %v376, 0
        %v532 = vsel %vm515, %v377, 0
        %v535 = vsel %vm515, %v378, 0
        %v538 = vsel %vm515, %v379, 0
        %540 = vmatprep.subr.bf16.mxu0 0
        %541 = vmatpush1.bf16.msra.mxu0 %v511
        %542 = vmatprep.subr.bf16.mxu0 0
        %543 = vmatpush1.bf16.msra.mxu0 %v512
        %544 = vmatprep.subr.bf16.mxu0 0
        %545 = vmatpush1.bf16.msra.mxu0 0
        %546 = vmatprep.subr.bf16.mxu0 0
        %547 = vmatpush1.bf16.msra.mxu0 0
        %548 = vmatprep.subr.bf16.mxu0 0
        %549 = vmatpush1.bf16.msra.mxu0 0
        %550 = vmatprep.subr.bf16.mxu0 0
        %551 = vmatpush1.bf16.msra.mxu0 0
        %552 = vmatprep.subr.bf16.mxu0 0
        %553 = vmatpush1.bf16.msra.mxu0 0
        %554 = vmatprep.subr.bf16.mxu0 0
        %555 = vmatpush1.bf16.msra.mxu0 0
        %556 = vmatprep.subr.bf16.mxu0 0
        %557 = vmatpush1.bf16.msra.mxu0 0
        %558 = vmatprep.subr.bf16.mxu0 0
        %559 = vmatpush1.bf16.msra.mxu0 0
        %560 = vmatprep.subr.bf16.mxu0 0
        %561 = vmatpush1.bf16.msra.mxu0 0
        %562 = vmatprep.subr.bf16.mxu0 0
        %563 = vmatpush1.bf16.msra.mxu0 0
        %564 = vmatprep.subr.bf16.mxu0 0
        %565 = vmatpush1.bf16.msra.mxu0 0
        %566 = vmatprep.subr.bf16.mxu0 0
        %567 = vmatpush1.bf16.msra.mxu0 0
        %568 = vmatprep.subr.bf16.mxu0 0
        %569 = vmatpush1.bf16.msra.mxu0 0
        %570 = vmatprep.subr.bf16.mxu0 0
        %571 = vmatpush1.bf16.msra.mxu0 0
        %572 = vmatprep.mubr.bf16.mxu0 0
        %573 = vmatmul.mubr.bf16.gmra.mrb[0].mxu0 %v517
        %v574 = vpop.f32.mrb[0].mxu0
        %v575 = vadd.f32 %v487, %v574
        %v576 = vpop.f32.mrb[0].mxu0
        %v577 = vpop.f32.mrb[0].mxu0
        %v578 = vadd.f32 %v488, %v577
        %v579 = vpop.f32.mrb[0].mxu0
        %580 = vmatprep.mubr.bf16.mxu0 0
        %581 = vmatmul.mubr.bf16.gmra.mrb[0].mxu0 %v520
        %v582 = vpop.f32.mrb[0].mxu0
        %v583 = vadd.f32 %v489, %v582
        %v584 = vpop.f32.mrb[0].mxu0
        %v585 = vpop.f32.mrb[0].mxu0
        %v586 = vadd.f32 %v490, %v585
        %v587 = vpop.f32.mrb[0].mxu0
        %588 = vmatprep.mubr.bf16.mxu0 0
        %589 = vmatmul.mubr.bf16.gmra.mrb[0].mxu0 %v523
        %v590 = vpop.f32.mrb[0].mxu0
        %v591 = vadd.f32 %v491, %v590
        %v592 = vpop.f32.mrb[0].mxu0
        %v593 = vpop.f32.mrb[0].mxu0
        %v594 = vadd.f32 %v492, %v593
        %v595 = vpop.f32.mrb[0].mxu0
        %596 = vmatprep.mubr.bf16.mxu0 0
        %597 = vmatmul.mubr.bf16.gmra.mrb[0].mxu0 %v526
        %v598 = vpop.f32.mrb[0].mxu0
        %v599 = vadd.f32 %v493, %v598
        %v600 = vpop.f32.mrb[0].mxu0
        %v601 = vpop.f32.mrb[0].mxu0
        %v602 = vadd.f32 %v494, %v601
        %v603 = vpop.f32.mrb[0].mxu0
        %604 = vmatprep.mubr.bf16.mxu0 0
        %605 = vmatmul.mubr.bf16.gmra.mrb[0].mxu0 %v529
        %v606 = vpop.f32.mrb[0].mxu0
        %v607 = vadd.f32 %v495, %v606
        %v608 = vpop.f32.mrb[0].mxu0
        %v609 = vpop.f32.mrb[0].mxu0
        %v610 = vadd.f32 %v496, %v609
        %v611 = vpop.f32.mrb[0].mxu0
        %612 = vmatprep.mubr.bf16.mxu0 0
        %613 = vmatmul.mubr.bf16.gmra.mrb[0].mxu0 %v532
        %v614 = vpop.f32.mrb[0].mxu0
        %v615 = vadd.f32 %v497, %v614
        %v616 = vpop.f32.mrb[0].mxu0
        %v617 = vpop.f32.mrb[0].mxu0
        %v618 = vadd.f32 %v498, %v617
        %v619 = vpop.f32.mrb[0].mxu0
        %620 = vmatprep.mubr.bf16.mxu0 0
        %621 = vmatmul.mubr.bf16.gmra.mrb[0].mxu0 %v535
        %v622 = vpop.f32.mrb[0].mxu0
        %v623 = vadd.f32 %v499, %v622
        %v624 = vpop.f32.mrb[0].mxu0
        %v625 = vpop.f32.mrb[0].mxu0
        %v626 = vadd.f32 %v500, %v625
        %v627 = vpop.f32.mrb[0].mxu0
        %628 = vmatprep.mubr.bf16.mxu0 0
        %629 = vmatmul.mubr.bf16.gmra.mrb[0].mxu0 %v538
        %v630 = vpop.f32.mrb[0].mxu0
        %v631 = vadd.f32 %v501, %v630
        %v632 = vpop.f32.mrb[0].mxu0
        %v633 = vpop.f32.mrb[0].mxu0
        %v634 = vadd.f32 %v502, %v633
        %v635 = vpop.f32.mrb[0].mxu0
        %636 = vdwg.mxu0
        %v637 = vld [vmem:[%s4] sm:$0x1]
        %v639 = vlaneseq
        %v640 = vshrl.u32 %v639, 7
        %v641 = vsub.s32 0, %v640
        %v642 = vrot.slane %v637, %v641
        %v644 = vadd.f32 %v575, %v642
        %v645 = vadd.f32 %v578, %v642
        %v646 = vadd.f32 %v583, %v642
        %v647 = vadd.f32 %v586, %v642
        %v648 = vadd.f32 %v591, %v642
        %v649 = vadd.f32 %v594, %v642
        %v650 = vadd.f32 %v599, %v642
        %v651 = vadd.f32 %v602, %v642
        %v652 = vadd.f32 %v607, %v642
        %v653 = vadd.f32 %v610, %v642
        %v654 = vadd.f32 %v615, %v642
        %v655 = vadd.f32 %v618, %v642
        %v656 = vadd.f32 %v623, %v642
        %v657 = vadd.f32 %v626, %v642
        %v658 = vadd.f32 %v631, %v642
        %v659 = vadd.f32 %v634, %v642
        %v660 = vmax.f32 %v644, 0.0
        %v661 = vmax.f32 %v645, 0.0
        %v662 = vmax.f32 %v646, 0.0
        %v663 = vmax.f32 %v647, 0.0
        %v664 = vmax.f32 %v648, 0.0
        %v665 = vmax.f32 %v649, 0.0
        %v666 = vmax.f32 %v650, 0.0
        %v667 = vmax.f32 %v651, 0.0
        %v668 = vmax.f32 %v652, 0.0
        %v669 = vmax.f32 %v653, 0.0
        %v670 = vmax.f32 %v654, 0.0
        %v671 = vmax.f32 %v655, 0.0
        %v672 = vmax.f32 %v656, 0.0
        %v673 = vmax.f32 %v657, 0.0
        %v674 = vmax.f32 %v658, 0.0
        %v675 = vmax.f32 %v659, 0.0
        %v676 = vpack.c.bf16 %v661, %v660
        %v677 = vpack.c.bf16 %v663, %v662
        %v678 = vpack.c.bf16 %v665, %v664
        %v679 = vpack.c.bf16 %v667, %v666
        %v680 = vpack.c.bf16 %v669, %v668
        %v681 = vpack.c.bf16 %v671, %v670
        %v682 = vpack.c.bf16 %v673, %v672
        %v683 = vpack.c.bf16 %v675, %v674
        %v684 = vld [vmem:[%s5] sm:$0xf]
        %v685 = vld [vmem:[%s5 + $0x4] sm:$0xf]
        %v686 = vld [vmem:[%s5 + $0x8] sm:$0xf]
        %v687 = vld [vmem:[%s5 + $0xc] sm:$0xf]
        %v688 = vld [vmem:[%s5 + $0x10] sm:$0xf]
        %v689 = vld [vmem:[%s5 + $0x14] sm:$0xf]
        %v690 = vld [vmem:[%s5 + $0x18] sm:$0xf]
        %v691 = vld [vmem:[%s5 + $0x1c] sm:$0xf]
        %v692 = vld [vmem:[%s5 + $0x20] sm:$0xf]
        %v693 = vld [vmem:[%s5 + $0x24] sm:$0xf]
        %v694 = vld [vmem:[%s5 + $0x28] sm:$0xf]
        %v695 = vld [vmem:[%s5 + $0x2c] sm:$0xf]
        %v696 = vld [vmem:[%s5 + $0x30] sm:$0xf]
        %v697 = vld [vmem:[%s5 + $0x34] sm:$0xf]
        %v698 = vld [vmem:[%s5 + $0x38] sm:$0xf]
        %v699 = vld [vmem:[%s5 + $0x3c] sm:$0xf]
        %v700 = vld [vmem:[%s6] sm:$0x1]
        %v702 = vlaneseq
        %v703 = vshrl.u32 %v702, 7
        %v704 = vsub.s32 0, %v703
        %v705 = vrot.slane %v700, %v704
        %v723 = vunpack.c.l.b16 %v684
        %v724 = vunpack.c.l.b16 %v685
        %v725 = vunpack.c.l.b16 %v686
        %v726 = vunpack.c.l.b16 %v687
        %v727 = vunpack.c.l.b16 %v688
        %v728 = vunpack.c.l.b16 %v689
        %v729 = vunpack.c.l.b16 %v690
        %v730 = vunpack.c.l.b16 %v691
        %v731 = vunpack.c.l.b16 %v692
        %v732 = vunpack.c.l.b16 %v693
        %v733 = vunpack.c.l.b16 %v694
        %v734 = vunpack.c.l.b16 %v695
        %v735 = vunpack.c.l.b16 %v696
        %v736 = vunpack.c.l.b16 %v697
        %v737 = vunpack.c.l.b16 %v698
        %v738 = vunpack.c.l.b16 %v699
        %v739 = vpack.c.b16 %v724, %v723
        %v740 = vpack.c.b16 %v726, %v725
        %v741 = vpack.c.b16 %v728, %v727
        %v742 = vpack.c.b16 %v730, %v729
        %v743 = vpack.c.b16 %v732, %v731
        %v744 = vpack.c.b16 %v734, %v733
        %v745 = vpack.c.b16 %v736, %v735
        %v746 = vpack.c.b16 %v738, %v737
        %755 = vmatprep.subr.bf16.mxu0 0
        %756 = vmatpush1.bf16.msra.mxu0 %v739
        %757 = vmatprep.subr.bf16.mxu0 0
        %758 = vmatpush1.bf16.msra.mxu0 %v740
        %759 = vmatprep.subr.bf16.mxu0 0
        %760 = vmatpush1.bf16.msra.mxu0 %v741
        %761 = vmatprep.subr.bf16.mxu0 0
        %762 = vmatpush1.bf16.msra.mxu0 %v742
        %763 = vmatprep.subr.bf16.mxu0 0
        %764 = vmatpush1.bf16.msra.mxu0 %v743
        %765 = vmatprep.subr.bf16.mxu0 0
        %766 = vmatpush1.bf16.msra.mxu0 %v744
        %767 = vmatprep.subr.bf16.mxu0 0
        %768 = vmatpush1.bf16.msra.mxu0 %v745
        %769 = vmatprep.subr.bf16.mxu0 0
        %770 = vmatpush1.bf16.msra.mxu0 %v746
        %771 = vmatprep.subr.bf16.mxu0 0
        %772 = vmatpush1.bf16.msra.mxu0 0
        %773 = vmatprep.subr.bf16.mxu0 0
        %774 = vmatpush1.bf16.msra.mxu0 0
        %775 = vmatprep.subr.bf16.mxu0 0
        %776 = vmatpush1.bf16.msra.mxu0 0
        %777 = vmatprep.subr.bf16.mxu0 0
        %778 = vmatpush1.bf16.msra.mxu0 0
        %779 = vmatprep.subr.bf16.mxu0 0
        %780 = vmatpush1.bf16.msra.mxu0 0
        %781 = vmatprep.subr.bf16.mxu0 0
        %782 = vmatpush1.bf16.msra.mxu0 0
        %783 = vmatprep.subr.bf16.mxu0 0
        %784 = vmatpush1.bf16.msra.mxu0 0
        %785 = vmatprep.subr.bf16.mxu0 0
        %786 = vmatpush1.bf16.msra.mxu0 0
        %787 = vmatprep.mubr.bf16.mxu0 0
        %788 = vmatmul.mubr.bf16.gmra.mrb[0].mxu0 %v676
        %v789 = vpop.f32.mrb[0].mxu0
        %v790 = vadd.f32 %v705, %v789
        %v791 = vpop.f32.mrb[0].mxu0
        %v792 = vpop.f32.mrb[0].mxu0
        %v793 = vadd.f32 %v705, %v792
        %v794 = vpop.f32.mrb[0].mxu0
        %795 = vmatprep.mubr.bf16.mxu0 0
        %796 = vmatmul.mubr.bf16.gmra.mrb[0].mxu0 %v677
        %v797 = vpop.f32.mrb[0].mxu0
        %v798 = vadd.f32 %v705, %v797
        %v799 = vpop.f32.mrb[0].mxu0
        %v800 = vpop.f32.mrb[0].mxu0
        %v801 = vadd.f32 %v705, %v800
        %v802 = vpop.f32.mrb[0].mxu0
        %803 = vmatprep.mubr.bf16.mxu0 0
        %804 = vmatmul.mubr.bf16.gmra.mrb[0].mxu0 %v678
        %v805 = vpop.f32.mrb[0].mxu0
        %v806 = vadd.f32 %v705, %v805
        %v807 = vpop.f32.mrb[0].mxu0
        %v808 = vpop.f32.mrb[0].mxu0
        %v809 = vadd.f32 %v705, %v808
        %v810 = vpop.f32.mrb[0].mxu0
        %811 = vmatprep.mubr.bf16.mxu0 0
        %812 = vmatmul.mubr.bf16.gmra.mrb[0].mxu0 %v679
        %v813 = vpop.f32.mrb[0].mxu0
        %v814 = vadd.f32 %v705, %v813
        %v815 = vpop.f32.mrb[0].mxu0
        %v816 = vpop.f32.mrb[0].mxu0
        %v817 = vadd.f32 %v705, %v816
        %v818 = vpop.f32.mrb[0].mxu0
        %819 = vmatprep.mubr.bf16.mxu0 0
        %820 = vmatmul.mubr.bf16.gmra.mrb[0].mxu0 %v680
        %v821 = vpop.f32.mrb[0].mxu0
        %v822 = vadd.f32 %v705, %v821
        %v823 = vpop.f32.mrb[0].mxu0
        %v824 = vpop.f32.mrb[0].mxu0
        %v825 = vadd.f32 %v705, %v824
        %v826 = vpop.f32.mrb[0].mxu0
        %827 = vmatprep.mubr.bf16.mxu0 0
        %828 = vmatmul.mubr.bf16.gmra.mrb[0].mxu0 %v681
        %v829 = vpop.f32.mrb[0].mxu0
        %v830 = vadd.f32 %v705, %v829
        %v831 = vpop.f32.mrb[0].mxu0
        %v832 = vpop.f32.mrb[0].mxu0
        %v833 = vadd.f32 %v705, %v832
        %v834 = vpop.f32.mrb[0].mxu0
        %835 = vmatprep.mubr.bf16.mxu0 0
        %836 = vmatmul.mubr.bf16.gmra.mrb[0].mxu0 %v682
        %v837 = vpop.f32.mrb[0].mxu0
        %v838 = vadd.f32 %v705, %v837
        %v839 = vpop.f32.mrb[0].mxu0
        %v840 = vpop.f32.mrb[0].mxu0
        %v841 = vadd.f32 %v705, %v840
        %v842 = vpop.f32.mrb[0].mxu0
        %843 = vmatprep.mubr.bf16.mxu0 0
        %844 = vmatmul.mubr.bf16.gmra.mrb[0].mxu0 %v683
        %v845 = vpop.f32.mrb[0].mxu0
        %v846 = vadd.f32 %v705, %v845
        %v847 = vpop.f32.mrb[0].mxu0
        %v848 = vpop.f32.mrb[0].mxu0
        %v849 = vadd.f32 %v705, %v848
        %v850 = vpop.f32.mrb[0].mxu0
        %851 = vdwg.mxu0
        %v852 = vmax.f32 %v790, 0.0
        %v853 = vmax.f32 %v793, 0.0
        %v854 = vmax.f32 %v798, 0.0
        %v855 = vmax.f32 %v801, 0.0
        %v856 = vmax.f32 %v806, 0.0
        %v857 = vmax.f32 %v809, 0.0
        %v858 = vmax.f32 %v814, 0.0
        %v859 = vmax.f32 %v817, 0.0
        %v860 = vmax.f32 %v822, 0.0
        %v861 = vmax.f32 %v825, 0.0
        %v862 = vmax.f32 %v830, 0.0
        %v863 = vmax.f32 %v833, 0.0
        %v864 = vmax.f32 %v838, 0.0
        %v865 = vmax.f32 %v841, 0.0
        %v866 = vmax.f32 %v846, 0.0
        %v867 = vmax.f32 %v849, 0.0
        %v868 = vld [vmem:[%s7] sm:$0x1]
        %v870 = vlaneseq
        %v871 = vshrl.u32 %v870, 7
        %v872 = vsub.s32 0, %v871
        %v873 = vrot.slane %v868, %v872
        %v875 = vmul.f32 %v852, %v873
        %v876 = vmul.f32 %v853, %v873
        %v877 = vmul.f32 %v854, %v873
        %v878 = vmul.f32 %v855, %v873
        %v879 = vmul.f32 %v856, %v873
        %v880 = vmul.f32 %v857, %v873
        %v881 = vmul.f32 %v858, %v873
        %v882 = vmul.f32 %v859, %v873
        %v883 = vmul.f32 %v860, %v873
        %v884 = vmul.f32 %v861, %v873
        %v885 = vmul.f32 %v862, %v873
        %v886 = vmul.f32 %v863, %v873
        %v887 = vmul.f32 %v864, %v873
        %v888 = vmul.f32 %v865, %v873
        %v889 = vmul.f32 %v866, %v873
        %v890 = vmul.f32 %v867, %v873
        %891 = vadd.xlane.f32.xlu0 %v875
        %v892 = vpop.xlane.xlu0 %891
        %893 = vadd.xlane.f32.xlu0 %v876
        %v894 = vpop.xlane.xlu0 %893
        %895 = vadd.xlane.f32.xlu0 %v877
        %v896 = vpop.xlane.xlu0 %895
        %897 = vadd.xlane.f32.xlu0 %v878
        %v898 = vpop.xlane.xlu0 %897
        %899 = vadd.xlane.f32.xlu0 %v879
        %v900 = vpop.xlane.xlu0 %899
        %901 = vadd.xlane.f32.xlu0 %v880
        %v902 = vpop.xlane.xlu0 %901
        %903 = vadd.xlane.f32.xlu0 %v881
        %v904 = vpop.xlane.xlu0 %903
        %905 = vadd.xlane.f32.xlu0 %v882
        %v906 = vpop.xlane.xlu0 %905
        %907 = vadd.xlane.f32.xlu0 %v883
        %v908 = vpop.xlane.xlu0 %907
        %909 = vadd.xlane.f32.xlu0 %v884
        %v910 = vpop.xlane.xlu0 %909
        %911 = vadd.xlane.f32.xlu0 %v885
        %v912 = vpop.xlane.xlu0 %911
        %913 = vadd.xlane.f32.xlu0 %v886
        %v914 = vpop.xlane.xlu0 %913
        %915 = vadd.xlane.f32.xlu0 %v887
        %v916 = vpop.xlane.xlu0 %915
        %917 = vadd.xlane.f32.xlu0 %v888
        %v918 = vpop.xlane.xlu0 %917
        %919 = vadd.xlane.f32.xlu0 %v889
        %v920 = vpop.xlane.xlu0 %919
        %921 = vadd.xlane.f32.xlu0 %v890
        %v922 = vpop.xlane.xlu0 %921
        %923 = vxpose.xlu0.b32.start [1/16] %v892, 128
        %924 = vxpose.xlu0.b32.cont [2/16] %v894, 128
        %925 = vxpose.xlu0.b32.cont [3/16] %v896, 128
        %926 = vxpose.xlu0.b32.cont [4/16] %v898, 128
        %927 = vxpose.xlu0.b32.cont [5/16] %v900, 128
        %928 = vxpose.xlu0.b32.cont [6/16] %v902, 128
        %929 = vxpose.xlu0.b32.cont [7/16] %v904, 128
        %930 = vxpose.xlu0.b32.cont [8/16] %v906, 128
        %931 = vxpose.xlu0.b32.cont [9/16] %v908, 128
        %932 = vxpose.xlu0.b32.cont [10/16] %v910, 128
        %933 = vxpose.xlu0.b32.cont [11/16] %v912, 128
        %934 = vxpose.xlu0.b32.cont [12/16] %v914, 128
        %935 = vxpose.xlu0.b32.cont [13/16] %v916, 128
        %936 = vxpose.xlu0.b32.cont [14/16] %v918, 128
        %937 = vxpose.xlu0.b32.cont [15/16] %v920, 128
        %938 = vxpose.xlu0.b32.end [16/16] %v922, 128
        %v939 = vpop.trf.xlu0
        %v940 = vpop.trf.xlu0
        %v941 = vpop.trf.xlu0
        %v942 = vpop.trf.xlu0
        %v943 = vpop.trf.xlu0
        %v944 = vpop.trf.xlu0
        %v945 = vpop.trf.xlu0
        %v946 = vpop.trf.xlu0
        %v947 = vpop.trf.xlu0
        %v948 = vpop.trf.xlu0
        %v949 = vpop.trf.xlu0
        %v950 = vpop.trf.xlu0
        %v951 = vpop.trf.xlu0
        %v952 = vpop.trf.xlu0
        %v953 = vpop.trf.xlu0
        %v954 = vpop.trf.xlu0
        %s955 = sld [smem:[#allocation2]]
        %v956 = vstv %s955
        %v957 = vadd.f32 %v939, %v956
        %958 = vst [vmem:[%s342] sm:$0x1] %v957
        %s959 = sand.u32 %s231, 1
        %s960 = scalar_lea.sflag [#allocation4], %s959
        %s961 = sand.u32 %s231, 1
        %s962 = scalar_lea.vmem [#allocation3], %s961
        // Predicated region
        $region57: #{critic_forward.1} parent=55 // pred_check
          %p963 = pneg %p241
        $region58: #{critic_forward.1} parent=55 // pred_check_branch
          %965 = sbr.rel (%p963) target = $region60
        $region59: #{critic_forward.1} parent=55 // pred_region
          %s967 = ssub.s32 16, 16
          %968 = vsyncadd %s960, %s967
          %s969 = smul.addr %s24, 16
          %s970 = scalar_lea.hbm %s9, %s969
          %s972 = sshll.u32 %s962, 4
          %s973 = int_to_ptr.vmem [resolvable:$true] %s972
          %975 = dma.vmem_to_hbm [thread:$0]  %s973, 16, %s970, %s960
        $region60: #{critic_forward.1} parent=55 // pred_fallthru
          _
      $region56: #{critic_forward.1} parent=5 // pred_fallthru
        _
      %p976 = scmp.le.s32.totalorder 2, %s19
      // Predicated region
      $region61: #{critic_forward.1} parent=5 // pred_check
        %p977 = pneg %p976
      $region62: #{critic_forward.1} parent=5 // pred_check_branch
        %979 = sbr.rel (%p977) target = $region64
      $region63: #{critic_forward.1} parent=5 // pred_region
        %s980 = ssub.s32 %s19, 2
        // Predicated region
        $region65: #{critic_forward.1} parent=63 // pred_check
          %p981 = pneg %p247
        $region66: #{critic_forward.1} parent=63 // pred_check_branch
          %983 = sbr.rel (%p981) target = $region68
        $region67: #{critic_forward.1} parent=63 // pred_region
          %s984 = sand.u32 %s232, 1
          %s985 = scalar_lea.sflag [#allocation4], %s984
          %s986 = sand.u32 %s232, 1
          %s987 = scalar_lea.vmem [#allocation3], %s986
          %988 = dma.done %s985, 16
        $region68: #{critic_forward.1} parent=63 // pred_fallthru
          _
      $region64: #{critic_forward.1} parent=5 // pred_fallthru
        _
    $region6: #{critic_forward.1} parent=1 // loop_footer
      %s23 = sadd.s32 1, %s19
    $region7: #{critic_forward.1} parent=1 // loop_footer_branch
      %18 = sbr.rel target = $region3
    $region8: #{critic_forward.1} parent=1 // loop_exit
      _
    %989 = vsyncpa [#allocation4], 1
    %s990 = scalar_lea.sflag [#allocation4], 1
    %991 = vsyncpa %s990, 1

</llo_original>
